<compile_context>
chip_gen: v5e
topology: v5e:2x2
jax: 0.10.0
libtpu: 0.0.40
codegen_flags: <defaults>
</compile_context>

<pallas_src>
import functools
import math

import jax
import jax.numpy as jnp
from jax import lax
from jax.experimental import pallas as pl
from jax.experimental.pallas import tpu as pltpu

P_KEEP = 0.5          # module default p=0.5 (probability that mask element == 1)
_LANES = 128
_SUBLANES = 8
_MAX_BLOCK_ROWS = 512


def _round_up(x, m):
    return ((x + m - 1) // m) * m


def _dropout_kernel(seed_ref, x_ref, o_ref, *, p, block_rows):
    """One lane-dense (block_rows, 128) tile: Bernoulli(p) keep-mask + select."""
    x = x_ref[...]

    # p is static -> these branches are resolved at trace time.
    if p >= 1.0:
        o_ref[...] = x
        return
    if p <= 0.0:
        o_ref[...] = jnp.zeros_like(x)
        return

    shape = o_ref.shape
    lanes = shape[1]

    # Global flat element index of every element in this tile.
    rows = lax.broadcasted_iota(jnp.int32, shape, 0)
    cols = lax.broadcasted_iota(jnp.int32, shape, 1)
    base = pl.program_id(0) * (block_rows * lanes)
    gidx = (base + rows * lanes + cols).astype(jnp.uint32)

    # Counter-based PRNG keyed on (seed, element index): lowbias32-style mixer.
    # Deliberately avoids pltpu.prng_seed / prng_random_bits (no CPU-interpret
    # lowering); on TPU these are ordinary VPU integer ops.
    seed = seed_ref[0].astype(jnp.uint32)
    h = gidx ^ (seed * jnp.uint32(0x9E3779B9))
    h = h ^ (h >> 16)
    h = h * jnp.uint32(0x7FEB352D)
    h = h ^ (h >> 15)
    h = h * jnp.uint32(0x846CA68B)
    h = h ^ (h >> 16)

    # P[keep] = p  <=>  h < round(p * 2^32)   (p strictly in (0, 1) here)
    thresh = jnp.uint32(min(max(int(round(p * 2.0 ** 32)), 1), 2 ** 32 - 1))
    o_ref[...] = jnp.where(h < thresh, x, jnp.zeros_like(x))


def _fused_dropout(seed_arr, slab, *, p, block_rows, grid, sizes, shapes):
    """One pallas_call over the fused lane-dense parameter slab; unpack after."""
    rows_pad, lanes = slab.shape
    kernel = functools.partial(_dropout_kernel, p=p, block_rows=block_rows)
    out_slab = pl.pallas_call(
        kernel,
        grid=(grid,),
        in_specs=[
            pl.BlockSpec(memory_space=pltpu.MemorySpace.SMEM),      # seed, (1,) int32
            pl.BlockSpec((block_rows, lanes), lambda i: (i, 0)),    # slab row-tile
        ],
        out_specs=pl.BlockSpec((block_rows, lanes), lambda i: (i, 0)),
        out_shape=jax.ShapeDtypeStruct((rows_pad, lanes), slab.dtype),
        compiler_params=pltpu.CompilerParams(
            dimension_semantics=("parallel",)),
    )(seed_arr, slab)

    flat = out_slab.reshape(-1)
    outs = []
    off = 0
    for size, shape in zip(sizes, shapes):
        outs.append(flat[off:off + size].reshape(shape))
        off += size
    return outs


class DropoutPallas:
    """JAX/Pallas equivalent of the PyTorch `dropout` module."""

    def __init__(self, params, p=P_KEEP):
        self.p = float(p)
        self.params = [jnp.asarray(x) for x in params]
        dtypes = {x.dtype for x in self.params}
        assert len(dtypes) == 1, "all params must share one dtype"
        self.shapes = tuple(tuple(x.shape) for x in self.params)
        self.sizes = tuple(int(math.prod(s)) for s in self.shapes)

        total = sum(self.sizes)
        rows = pl.cdiv(total, _LANES)
        block_rows = min(_MAX_BLOCK_ROWS, _round_up(rows, _SUBLANES))
        rows_pad = _round_up(rows, block_rows)
        grid = rows_pad // block_rows

        # Build the fused, padded, lane-dense slab once at construction.
        flat = jnp.concatenate([x.reshape(-1) for x in self.params])
        flat = jnp.pad(flat, (0, rows_pad * _LANES - total))
        self.slab = flat.reshape(rows_pad, _LANES)

        self._fwd = jax.jit(functools.partial(
            _fused_dropout,
            p=self.p,
            block_rows=block_rows,
            grid=grid,
            sizes=self.sizes,
            shapes=self.shapes,
        ))

    def forward(self, seed):
        seed_arr = jnp.asarray([int(seed)], dtype=jnp.int32)
        return self._fwd(seed_arr, self.slab)


if __name__ == "__main__":
    # Deterministic synthetic parameters (the module clones whatever params it
    # is handed; arbitrary small 2-D weight matrices here).
    key = jax.random.PRNGKey(0)
    k0, k1, k2 = jax.random.split(key, 3)
    params = [
        jax.random.normal(k0, (32, 64), dtype=jnp.float32),
        jax.random.normal(k1, (16, 128), dtype=jnp.float32),
        jax.random.normal(k2, (8, 128), dtype=jnp.float32),
    ]

    mod = DropoutPallas(params, p=P_KEEP)
    outs = mod.forward(seed=1234)
    outs = [jax.block_until_ready(o) for o in outs]

    # Sanity 1: every output element is either 0 or equal to the original param.
    for o, prm in zip(outs, params):
        assert o.shape == prm.shape and o.dtype == prm.dtype
        ok = jnp.all((o == 0) | (o == prm))
        assert bool(ok), "masked output has unexpected values"

    # Sanity 2: keep fraction is roughly p over all elements (loose bound).
    kept = sum(int(jnp.sum(o != 0)) for o in outs)
    total = sum(o.size for o in outs)
    frac = kept / total
    assert 0.35 < frac < 0.65, f"keep fraction {frac} far from p={P_KEEP}"

    # Sanity 3: deterministic per seed, different across seeds.
    outs2 = mod.forward(seed=1234)
    outs3 = mod.forward(seed=4321)
    assert all(bool(jnp.array_equal(a, b)) for a, b in zip(outs, outs2))
    assert any(not bool(jnp.array_equal(a, b)) for a, b in zip(outs, outs3))

    print("KERNEL_OK")
</pallas_src>

<mosaic_0001>
module attributes {stable_mosaic.version = 11 : i64} {
  func.func @_dropout_kernel(%arg0: i32, %arg1: memref<1xi32, #tpu.memory_space<smem>>, %arg2: memref<40x128xf32, #tpu.memory_space<vmem>>, %arg3: memref<40x128xf32, #tpu.memory_space<vmem>>) attributes {dimension_semantics = [#tpu.dimension_semantics<parallel>], iteration_bounds = array<i64: 1>, scalar_prefetch = 0 : i64, scratch_operands = 0 : i64, tpu.core_type = #tpu.core_type<tc>, window_params = [{transform_indices = @transform_0, window_bounds = array<i64: 1>}, {transform_indices = @transform_1, window_bounds = array<i64: 40, 128>}, {transform_indices = @transform_2, window_bounds = array<i64: 40, 128>}]} {
    %c0 = arith.constant 0 : index
    %c0_0 = arith.constant 0 : index
    %0 = vector.load %arg2[%c0, %c0_0] : memref<40x128xf32, #tpu.memory_space<vmem>>, vector<40x128xf32>
    %1 = tpu.iota {dimensions = array<i32: 0>} : vector<40x128xi32>
    %2 = tpu.iota {dimensions = array<i32: 1>} : vector<40x128xi32>
    %c5120_i32 = arith.constant 5120 : i32
    %3 = arith.muli %arg0, %c5120_i32 : i32
    %c128_i32 = arith.constant 128 : i32
    %4 = vector.broadcast %c128_i32 : i32 to vector<40x128xi32>
    %5 = arith.muli %1, %4 : vector<40x128xi32>
    %6 = vector.broadcast %3 : i32 to vector<40x128xi32>
    %7 = arith.addi %6, %5 : vector<40x128xi32>
    %8 = arith.addi %7, %2 : vector<40x128xi32>
    %c0_1 = arith.constant 0 : index
    %9 = memref.load %arg1[%c0_1] : memref<1xi32, #tpu.memory_space<smem>>
    %c-1640531527_i32 = arith.constant -1640531527 : i32
    %10 = arith.muli %9, %c-1640531527_i32 : i32
    %11 = vector.broadcast %10 : i32 to vector<40x128xi32>
    %12 = arith.xori %8, %11 : vector<40x128xi32>
    %c16_i32 = arith.constant 16 : i32
    %13 = vector.broadcast %c16_i32 : i32 to vector<40x128xi32>
    %14 = arith.shrui %12, %13 : vector<40x128xi32>
    %15 = arith.xori %12, %14 : vector<40x128xi32>
    %c2146121005_i32 = arith.constant 2146121005 : i32
    %16 = vector.broadcast %c2146121005_i32 : i32 to vector<40x128xi32>
    %17 = arith.muli %15, %16 : vector<40x128xi32>
    %c15_i32 = arith.constant 15 : i32
    %18 = vector.broadcast %c15_i32 : i32 to vector<40x128xi32>
    %19 = arith.shrui %17, %18 : vector<40x128xi32>
    %20 = arith.xori %17, %19 : vector<40x128xi32>
    %c-2073254261_i32 = arith.constant -2073254261 : i32
    %21 = vector.broadcast %c-2073254261_i32 : i32 to vector<40x128xi32>
    %22 = arith.muli %20, %21 : vector<40x128xi32>
    %c16_i32_2 = arith.constant 16 : i32
    %23 = vector.broadcast %c16_i32_2 : i32 to vector<40x128xi32>
    %24 = arith.shrui %22, %23 : vector<40x128xi32>
    %25 = arith.xori %22, %24 : vector<40x128xi32>
    %c-2147483648_i32 = arith.constant -2147483648 : i32
    %26 = vector.broadcast %c-2147483648_i32 : i32 to vector<40x128xi32>
    %27 = arith.cmpi ult, %25, %26 : vector<40x128xi32>
    %cst = arith.constant 0.000000e+00 : f32
    %28 = vector.broadcast %cst : f32 to vector<40x128xf32>
    %29 = arith.select %27, %0, %28 : vector<40x128xi1>, vector<40x128xf32>
    %c0_3 = arith.constant 0 : index
    %c0_4 = arith.constant 0 : index
    %30 = vector.load %arg3[%c0_3, %c0_4] : memref<40x128xf32, #tpu.memory_space<vmem>>, vector<40x128xf32>
    tpu.vector_store %arg3[%c0_3, %c0_4], %29 {strides = array<i32>} : memref<40x128xf32, #tpu.memory_space<vmem>>, vector<40x128xf32>,
    return
  }
  func.func @transform_0(%arg0: i32) -> i32 {
    %c0_i32 = arith.constant 0 : i32
    %c0_i32_0 = arith.constant 0 : i32
    return %c0_i32 : i32
  }
  func.func @transform_1(%arg0: i32) -> (i32, i32) {
    %c0_i32 = arith.constant 0 : i32
    %c0_i32_0 = arith.constant 0 : i32
    return %arg0, %c0_i32 : i32, i32
  }
  func.func @transform_2(%arg0: i32) -> (i32, i32) {
    %c0_i32 = arith.constant 0 : i32
    %c0_i32_0 = arith.constant 0 : i32
    return %arg0, %c0_i32 : i32, i32
  }
}

</mosaic_0001>

<llo_original>
// kernel: _fused_dropout.1
$region0: #{_fused_dropout.1}
  #allocation0 [shape = 'u32[]', space=smem, size = 0x4, offset = 0x4, fixed_abs, tag = 'smem constant byte address 0x4 - core index']
  #allocation1 [shape = 'u32[72,128]{1,0:T(1,128)}', space=vmem, size = 0x9000, scoped, tag = 'internal scratch']
  #allocation2 [shape = 's32[1]{0:T(128)S(6)}', space=smem, size = 0x200, scoped, tag = 'scoped memory for _fused_dropout.1']
  %s0 = inlined_call_operand.<no memory space> [shape: s32[1], index: 0, kind: input, shape index: {}]
  %s1 = inlined_call_operand.hbm [shape: f32[40,128], index: 1, kind: input, shape index: {}]
  %s2 = inlined_call_operand.vmem [shape: f32[40,128], index: 2, kind: output, shape index: {}]
  %s3 = sld [smem:[#allocation0]]
  $region22: #{_fused_dropout.1} parent=0
    _
  %s5 = ssub.s32 1, %s3
  %s6 = scalar_select 0, %s5, %s3
  %7 = sst [smem:[#allocation2]] %s0
  $region1: #{_fused_dropout.1} parent=0
    #allocation3 [shape = 'u8[20480]{0}', space=vmem, size = 0x5000, scoped, tag = 'input window, operand 1, single buffered']
    #allocation4 [shape = 's32[1]{0}', space=sflag, size = 0x4, scoped, tag = 'scoped memory for _fused_dropout.1']
    %8 = vsyncpa [#allocation4], 0
    // Predicated region
    $region2: #{_fused_dropout.1} parent=1 // pred_check
      _
    $region3: #{_fused_dropout.1} parent=1 // pred_check_branch
      %10 = sbr.rel (0) target = $region5
    $region4: #{_fused_dropout.1} parent=1 // pred_region
      _
    $region5: #{_fused_dropout.1} parent=1 // pred_fallthru
      _
    // Predicated region
    $region6: #{_fused_dropout.1} parent=1 // pred_check
      _
    $region7: #{_fused_dropout.1} parent=1 // pred_check_branch
      %12 = sbr.rel (0) target = $region9
    $region8: #{_fused_dropout.1} parent=1 // pred_region
      %14 = vsyncadd [#allocation4], 0
      %s15 = sshll.u32 %s1, 4
      %s16 = int_to_ptr.hbm [resolvable:$true] %s15
      %s17 = sshll.u32 [#allocation3], 4
      %s18 = int_to_ptr.vmem [resolvable:$true] %s17
      %23 = dma.hbm_to_vmem [thread:$0]  %s16, 640, %s18, [#allocation4], 128, 128, 8
    $region9: #{_fused_dropout.1} parent=1 // pred_fallthru
      _
    // Predicated region
    $region10: #{_fused_dropout.1} parent=1 // pred_check
      _
    $region11: #{_fused_dropout.1} parent=1 // pred_check_branch
      %25 = sbr.rel (0) target = $region13
    $region12: #{_fused_dropout.1} parent=1 // pred_region
      %27 = dma.done [#allocation4], 640
    $region13: #{_fused_dropout.1} parent=1 // pred_fallthru
      _
    %v28 = vld [vmem:[#allocation3] sm:$0xff]
    %v29 = vld [vmem:[#allocation3 + $0x8] sm:$0xff]
    %v30 = vld [vmem:[#allocation3 + $0x10] sm:$0xff]
    %v31 = vld [vmem:[#allocation3 + $0x18] sm:$0xff]
    %v32 = vld [vmem:[#allocation3 + $0x20] sm:$0xff]
    %v33 = vlaneseq
    %v34 = vshrl.u32 %v33, 7
    %v35 = vadd.s32 %v34, 8
    %v36 = vadd.s32 %v34, 16
    %v37 = vadd.s32 %v34, 24
    %v38 = vadd.s32 %v34, 32
    %v39 = vlaneseq
    %v40 = vand.u32 %v39, 127
    %s41 = smul.u32 0, 5120
    %v42 = vmul.u32 %v34, 128
    %v43 = vmul.u32 %v35, 128
    %v44 = vmul.u32 %v36, 128
    %v45 = vmul.u32 %v37, 128
    %v46 = vmul.u32 %v38, 128
    %v47 = vstv %s41
    %v48 = vadd.s32 %v47, %v42
    %v49 = vadd.s32 %v47, %v43
    %v50 = vadd.s32 %v47, %v44
    %v51 = vadd.s32 %v47, %v45
    %v52 = vadd.s32 %v47, %v46
    %v53 = vadd.s32 %v48, %v40
    %v54 = vadd.s32 %v49, %v40
    %v55 = vadd.s32 %v50, %v40
    %v56 = vadd.s32 %v51, %v40
    %v57 = vadd.s32 %v52, %v40
    %s58 = sld [smem:[#allocation2]]
    %s59 = smul.u32 %s58, 2654435769
    %v60 = vstv %s59
    %v61 = vxor.u32 %v53, %v60
    %v62 = vxor.u32 %v54, %v60
    %v63 = vxor.u32 %v55, %v60
    %v64 = vxor.u32 %v56, %v60
    %v65 = vxor.u32 %v57, %v60
    %v66 = vshrl.u32 %v61, 16
    %v67 = vshrl.u32 %v62, 16
    %v68 = vshrl.u32 %v63, 16
    %v69 = vshrl.u32 %v64, 16
    %v70 = vshrl.u32 %v65, 16
    %v71 = vxor.u32 %v61, %v66
    %v72 = vxor.u32 %v62, %v67
    %v73 = vxor.u32 %v63, %v68
    %v74 = vxor.u32 %v64, %v69
    %v75 = vxor.u32 %v65, %v70
    %v76 = vmul.u32 %v71, 2146121005
    %v77 = vmul.u32 %v72, 2146121005
    %v78 = vmul.u32 %v73, 2146121005
    %v79 = vmul.u32 %v74, 2146121005
    %v80 = vmul.u32 %v75, 2146121005
    %v81 = vshrl.u32 %v76, 15
    %v82 = vshrl.u32 %v77, 15
    %v83 = vshrl.u32 %v78, 15
    %v84 = vshrl.u32 %v79, 15
    %v85 = vshrl.u32 %v80, 15
    %v86 = vxor.u32 %v76, %v81
    %v87 = vxor.u32 %v77, %v82
    %v88 = vxor.u32 %v78, %v83
    %v89 = vxor.u32 %v79, %v84
    %v90 = vxor.u32 %v80, %v85
    %v91 = vmul.u32 %v86, 2221713035
    %v92 = vmul.u32 %v87, 2221713035
    %v93 = vmul.u32 %v88, 2221713035
    %v94 = vmul.u32 %v89, 2221713035
    %v95 = vmul.u32 %v90, 2221713035
    %v96 = vshrl.u32 %v91, 16
    %v97 = vshrl.u32 %v92, 16
    %v98 = vshrl.u32 %v93, 16
    %v99 = vshrl.u32 %v94, 16
    %v100 = vshrl.u32 %v95, 16
    %v101 = vxor.u32 %v91, %v96
    %v102 = vxor.u32 %v92, %v97
    %v103 = vxor.u32 %v93, %v98
    %v104 = vxor.u32 %v94, %v99
    %v105 = vxor.u32 %v95, %v100
    %v106 = vadd.s32 %v101, 2147483648
    %vm108 = vcmp.lt.s32.totalorder %v106, 0
    %v109 = vadd.s32 %v102, 2147483648
    %vm111 = vcmp.lt.s32.totalorder %v109, 0
    %v112 = vadd.s32 %v103, 2147483648
    %vm114 = vcmp.lt.s32.totalorder %v112, 0
    %v115 = vadd.s32 %v104, 2147483648
    %vm117 = vcmp.lt.s32.totalorder %v115, 0
    %v118 = vadd.s32 %v105, 2147483648
    %vm120 = vcmp.lt.s32.totalorder %v118, 0
    %v121 = vsel %vm108, %v28, 0.0
    %v122 = vsel %vm111, %v29, 0.0
    %v123 = vsel %vm114, %v30, 0.0
    %v124 = vsel %vm117, %v31, 0.0
    %v125 = vsel %vm120, %v32, 0.0
    %126 = vst [vmem:[%s2] sm:$0xff] %v121
    %127 = vst [vmem:[%s2 + $0x8] sm:$0xff] %v122
    %128 = vst [vmem:[%s2 + $0x10] sm:$0xff] %v123
    %129 = vst [vmem:[%s2 + $0x18] sm:$0xff] %v124
    %130 = vst [vmem:[%s2 + $0x20] sm:$0xff] %v125
    // Predicated region
    $region14: #{_fused_dropout.1} parent=1 // pred_check
      _
    $region15: #{_fused_dropout.1} parent=1 // pred_check_branch
      %132 = sbr.rel (0) target = $region17
    $region16: #{_fused_dropout.1} parent=1 // pred_region
      _
    $region17: #{_fused_dropout.1} parent=1 // pred_fallthru
      _
    // Predicated region
    $region18: #{_fused_dropout.1} parent=1 // pred_check
      _
    $region19: #{_fused_dropout.1} parent=1 // pred_check_branch
      %134 = sbr.rel (0) target = $region21
    $region20: #{_fused_dropout.1} parent=1 // pred_region
      _
    $region21: #{_fused_dropout.1} parent=1 // pred_fallthru
      _
    %135 = vsyncpa [#allocation4], 1

</llo_original>
